<compile_context>
chip_gen: v6e
topology: v6e:2x2x1
jax: 0.10.0
libtpu: 0.0.40
codegen_flags: <defaults>
</compile_context>

<pallas_src>
import jax
import jax.numpy as jnp
from jax import lax
from jax.experimental import pallas as pl
from jax.experimental.pallas import tpu as pltpu


def pow_int_kernel(k_ref, x_ref, o_ref):
    """out = (x ** x) ** k, elementwise int32 (wraparound semantics)."""
    x = x_ref[...]          # int32 tile in VMEM
    k = k_ref[0]            # scalar int32 in SMEM (scalar prefetch)

    # ---- y = x ** x : binary exponentiation, vector exponent ---------------
    # Dynamic trip count: iterate only while the largest remaining exponent is
    # nonzero (== 32 - clz(max(x)) iterations instead of a fixed 31).
    em0 = jnp.maximum(jnp.max(x), 0)   # scalar trip-count governor (x >= 0)

    def x_cond(carry):
        _res, _b, _e, em = carry
        return em > 0

    def x_body(carry):
        res, b, e, em = carry
        res = jnp.where((e & 1) == 1, res * b, res)
        return res, b * b, e >> 1, em >> 1

    y, _, _, _ = lax.while_loop(
        x_cond, x_body, (jnp.ones_like(x), x, x, em0))

    # ---- out = y ** k : scalar exponent, bookkeeping on the scalar unit ----
    def k_cond(carry):
        _res, _b, ek = carry
        return ek > 0

    def k_body(carry):
        res, b, ek = carry
        bit = (ek & 1) == 1                    # scalar ALU
        res = jnp.where(bit, res * b, res)     # scalar predicate broadcast
        return res, b * b, ek >> 1

    out, _, _ = lax.while_loop(k_cond, k_body, (jnp.ones_like(y), y, k))

    o_ref[...] = out


def pow_int(x, k, *, block_rows=512):
    """x: int32 array (any shape), k: int32 array of shape (1,)."""
    orig_shape = x.shape
    n = x.size
    lanes = 128

    # Lane-dense layout: flatten to (rows, 128). Pad rows up to a multiple of
    # 8 sublanes so the block shape is always legal. Padding value 0 is
    # harmless for this op (0**0 == 1, 1**k == 1) and is sliced off below.
    rows = pl.cdiv(n, lanes)
    rows_pad = ((rows + 7) // 8) * 8
    n_pad = rows_pad * lanes

    xf = x.reshape(-1)
    if n_pad != n:
        xf = jnp.pad(xf, (0, n_pad - n))
    x2 = xf.reshape(rows_pad, lanes)

    br = min(block_rows, rows_pad)
    grid = (pl.cdiv(rows_pad, br),)

    out = pl.pallas_call(
        pow_int_kernel,
        out_shape=jax.ShapeDtypeStruct((rows_pad, lanes), x2.dtype),
        grid_spec=pltpu.PrefetchScalarGridSpec(
            num_scalar_prefetch=1,                      # k -> SMEM
            grid=grid,
            in_specs=[pl.BlockSpec((br, lanes), lambda i, k_ref: (i, 0))],
            out_specs=pl.BlockSpec((br, lanes), lambda i, k_ref: (i, 0)),
        ),
        compiler_params=pltpu.CompilerParams(
            dimension_semantics=("parallel",)),
    )(k, x2)

    return out.reshape(-1)[:n].reshape(orig_shape)


if __name__ == "__main__":
    key = jax.random.PRNGKey(0)
    # Small non-negative ints so (x**x)**k stays well inside int32 range.
    x = jax.random.randint(key, (2, 4, 16, 16), minval=0, maxval=5, dtype=jnp.int32)
    k = jnp.array([2], dtype=jnp.int32)

    out = jax.block_until_ready(pow_int(x, k))

    # Reference with identical int32 wraparound semantics (exp >= 0, 0**0 == 1).
    def ref_ipow(base, exp):
        res, b, e = jnp.ones_like(base), base, exp
        for _ in range(31):
            res = jnp.where((e & 1) == 1, res * b, res)
            b, e = b * b, e >> 1
        return res

    ref = ref_ipow(ref_ipow(x, x), jnp.full(x.shape, k[0], dtype=x.dtype))
    assert jnp.array_equal(out, ref), "mismatch vs reference"

    print("KERNEL_OK")
</pallas_src>

<mosaic_0001>
module attributes {stable_mosaic.version = 11 : i64} {
  func.func @pow_int_kernel(%arg0: i32, %arg1: memref<1xi32, #tpu.memory_space<smem>>, %arg2: memref<16x128xi32, #tpu.memory_space<vmem>>, %arg3: memref<16x128xi32, #tpu.memory_space<vmem>>) attributes {dimension_semantics = [#tpu.dimension_semantics<parallel>], iteration_bounds = array<i64: 1>, scalar_prefetch = 1 : i64, scratch_operands = 0 : i64, tpu.core_type = #tpu.core_type<tc>, window_params = [{transform_indices = @transform_0, window_bounds = array<i64: 16, 128>}, {transform_indices = @transform_1, window_bounds = array<i64: 16, 128>}]} {
    %c0 = arith.constant 0 : index
    %c0_0 = arith.constant 0 : index
    %0 = vector.load %arg2[%c0, %c0_0] : memref<16x128xi32, #tpu.memory_space<vmem>>, vector<16x128xi32>
    %c0_1 = arith.constant 0 : index
    %1 = memref.load %arg1[%c0_1] : memref<1xi32, #tpu.memory_space<smem>>
    %2 = vector.shape_cast %0 : vector<16x128xi32> to vector<1x16x128xi32>
    %cst = arith.constant dense<-2147483648> : vector<1xi32>
    %3 = vector.multi_reduction <maxsi>, %2, %cst [1, 2] : vector<1x16x128xi32> to vector<1xi32>
    %4 = vector.shape_cast %3 : vector<1xi32> to vector<1x1x1xi32>
    %5 = vector.extract %4[0, 0, 0] : i32 from vector<1x1x1xi32>
    %c0_i32 = arith.constant 0 : i32
    %6 = arith.maxsi %5, %c0_i32 : i32
    %c1_i32 = arith.constant 1 : i32
    %7 = vector.broadcast %c1_i32 : i32 to vector<16x128xi32>
    %8:4 = scf.while (%arg4 = %7, %arg5 = %0, %arg6 = %0, %arg7 = %6) : (vector<16x128xi32>, vector<16x128xi32>, vector<16x128xi32>, i32) -> (vector<16x128xi32>, vector<16x128xi32>, vector<16x128xi32>, i32) {
      %c0_i32_5 = arith.constant 0 : i32
      %12 = arith.cmpi sgt, %arg7, %c0_i32_5 : i32
      scf.condition(%12) %arg4, %arg5, %arg6, %arg7 : vector<16x128xi32>, vector<16x128xi32>, vector<16x128xi32>, i32
    } do {
    ^bb0(%arg4: vector<16x128xi32>, %arg5: vector<16x128xi32>, %arg6: vector<16x128xi32>, %arg7: i32):
      %c1_i32_5 = arith.constant 1 : i32
      %12 = vector.broadcast %c1_i32_5 : i32 to vector<16x128xi32>
      %13 = arith.andi %arg6, %12 : vector<16x128xi32>
      %c1_i32_6 = arith.constant 1 : i32
      %14 = vector.broadcast %c1_i32_6 : i32 to vector<16x128xi32>
      %15 = arith.cmpi eq, %13, %14 : vector<16x128xi32>
      %16 = arith.muli %arg4, %arg5 : vector<16x128xi32>
      %17 = arith.select %15, %16, %arg4 : vector<16x128xi1>, vector<16x128xi32>
      %18 = arith.muli %arg5, %arg5 : vector<16x128xi32>
      %c1_i32_7 = arith.constant 1 : i32
      %19 = vector.broadcast %c1_i32_7 : i32 to vector<16x128xi32>
      %20 = arith.shrsi %arg6, %19 : vector<16x128xi32>
      %c1_i32_8 = arith.constant 1 : i32
      %21 = arith.shrsi %arg7, %c1_i32_8 : i32
      scf.yield %17, %18, %20, %21 : vector<16x128xi32>, vector<16x128xi32>, vector<16x128xi32>, i32
    }
    %c1_i32_2 = arith.constant 1 : i32
    %9 = vector.broadcast %c1_i32_2 : i32 to vector<16x128xi32>
    %10:3 = scf.while (%arg4 = %9, %arg5 = %8#0, %arg6 = %1) : (vector<16x128xi32>, vector<16x128xi32>, i32) -> (vector<16x128xi32>, vector<16x128xi32>, i32) {
      %c0_i32_5 = arith.constant 0 : i32
      %12 = arith.cmpi sgt, %arg6, %c0_i32_5 : i32
      scf.condition(%12) %arg4, %arg5, %arg6 : vector<16x128xi32>, vector<16x128xi32>, i32
    } do {
    ^bb0(%arg4: vector<16x128xi32>, %arg5: vector<16x128xi32>, %arg6: i32):
      %c1_i32_5 = arith.constant 1 : i32
      %12 = arith.andi %arg6, %c1_i32_5 : i32
      %c1_i32_6 = arith.constant 1 : i32
      %13 = arith.cmpi eq, %12, %c1_i32_6 : i32
      %14 = arith.muli %arg4, %arg5 : vector<16x128xi32>
      %15 = arith.select %13, %14, %arg4 : vector<16x128xi32>
      %16 = arith.muli %arg5, %arg5 : vector<16x128xi32>
      %c1_i32_7 = arith.constant 1 : i32
      %17 = arith.shrsi %arg6, %c1_i32_7 : i32
      scf.yield %15, %16, %17 : vector<16x128xi32>, vector<16x128xi32>, i32
    }
    %c0_3 = arith.constant 0 : index
    %c0_4 = arith.constant 0 : index
    %11 = vector.load %arg3[%c0_3, %c0_4] : memref<16x128xi32, #tpu.memory_space<vmem>>, vector<16x128xi32>
    tpu.vector_store %arg3[%c0_3, %c0_4], %10#0 {strides = array<i32>} : memref<16x128xi32, #tpu.memory_space<vmem>>, vector<16x128xi32>,
    return
  }
  func.func @transform_0(%arg0: i32, %arg1: memref<1xi32, #tpu.memory_space<smem>>) -> (i32, i32) {
    %c0_i32 = arith.constant 0 : i32
    %c0_i32_0 = arith.constant 0 : i32
    return %arg0, %c0_i32 : i32, i32
  }
  func.func @transform_1(%arg0: i32, %arg1: memref<1xi32, #tpu.memory_space<smem>>) -> (i32, i32) {
    %c0_i32 = arith.constant 0 : i32
    %c0_i32_0 = arith.constant 0 : i32
    return %arg0, %c0_i32 : i32, i32
  }
}

</mosaic_0001>

<llo_original>
// kernel: tpu_custom_call.1
$region0: #{tpu_custom_call.1}
  #allocation0 [shape = 'u32[]', space=smem, size = 0x4, offset = 0x4, fixed_abs, tag = 'smem constant byte address 0x4 - core index']
  #allocation1 [shape = 'u32[144,128]{1,0:T(1,128)}', space=vmem, size = 0x12000, scoped, tag = 'internal scratch']
  #allocation2 [shape = 's32[1]{0}', space=sflag, size = 0x4, scoped, tag = 'scoped memory for tpu_custom_call.1']
  #allocation3 [shape = 's32[1]{0:T(128)S(6)}', space=smem, size = 0x200, scoped, tag = 'prefetched SMEM operand 0']
  %s0 = inlined_call_operand.<no memory space> [shape: s32[1], index: 0, kind: input, shape index: {}]
  %s1 = inlined_call_operand.hbm [shape: s32[16,128], index: 1, kind: input, shape index: {}]
  %s2 = inlined_call_operand.hbm [shape: s32[16,128], index: 2, kind: output, shape index: {}]
  %s3 = sld [smem:[#allocation0]]
  $region32: #{tpu_custom_call.1} parent=0
    _
  %s5 = ssub.s32 1, %s3
  %s6 = scalar_select 0, %s5, %s3
  %7 = sst [smem:[#allocation3]] %s0
  $region1: #{tpu_custom_call.1} parent=0
    #allocation4 [shape = 'u8[8192]{0}', space=vmem, size = 0x2000, scoped, tag = 'input window, operand 1, single buffered']
    #allocation5 [shape = 's32[1]{0}', space=sflag, size = 0x4, scoped, tag = 'scoped memory for tpu_custom_call.1']
    #allocation6 [shape = 's32[1]{0}', space=sflag, size = 0x4, scoped, tag = 'scoped memory for tpu_custom_call.1']
    #allocation7 [shape = 'u8[8192]{0}', space=vmem, size = 0x2000, scoped, tag = 'output window, operand 0, single buffered']
    %8 = vsyncpa [#allocation5], 0
    %9 = vsyncpa [#allocation6], 0
    // Predicated region
    $region2: #{tpu_custom_call.1} parent=1 // pred_check
      _
    $region3: #{tpu_custom_call.1} parent=1 // pred_check_branch
      %11 = sbr.rel (0) target = $region5
    $region4: #{tpu_custom_call.1} parent=1 // pred_region
      %s13 = ssub.s32 256, 256
      %14 = vsyncadd [#allocation5], %s13
      %s15 = sshll.u32 [#allocation4], 4
      %s16 = int_to_ptr.vmem [resolvable:$true] %s15
      %21 = dma.hbm_to_vmem [thread:$0]  %s1, 256, %s16, [#allocation5], 128, 128, 8
    $region5: #{tpu_custom_call.1} parent=1 // pred_fallthru
      _
    // Predicated region
    $region6: #{tpu_custom_call.1} parent=1 // pred_check
      _
    $region7: #{tpu_custom_call.1} parent=1 // pred_check_branch
      %23 = sbr.rel (0) target = $region9
    $region8: #{tpu_custom_call.1} parent=1 // pred_region
      %24 = dma.done [#allocation5], 256
    $region9: #{tpu_custom_call.1} parent=1 // pred_fallthru
      _
    %v25 = vld [vmem:[#allocation4] sm:$0xff]
    %v26 = vld [vmem:[#allocation4 + $0x8] sm:$0xff]
    %s27 = sld [smem:[#allocation3]]
    %vm28 = vcmp.gt.s32.totalorder %v25, %v26
    %v29 = vsel %vm28, %v25, %v26
    %v30 = vand.u32 %v29, 65535
    %v31 = vshra.s32 %v29, 16
    %v32 = vcvt.s32.f32 %v30
    %v33 = vcvt.s32.f32 %v31
    %34 = vmax.xlane.f32.xlu0 %v33
    %v35 = vpop.xlane.xlu0 %34
    %vm36 = vcmp.eq.f32.partialorder %v33, %v35
    %v37 = vsel %vm36, %v32, -inf
    %38 = vmax.xlane.f32.xlu0 %v37
    %v39 = vpop.xlane.xlu0 %38
    %v40 = vcvt.f32.s32 %v39
    %v41 = vcvt.f32.s32 %v35
    %v42 = vshll.u32 %v41, 16
    %v43 = vadd.s32 %v42, %v40
    %v44 = vrot.slane %v43, 4
    %vm45 = vcmp.gt.s32.totalorder %v43, %v44
    %v46 = vsel %vm45, %v43, %v44
    %v47 = vrot.slane %v46, 2
    %vm48 = vcmp.gt.s32.totalorder %v46, %v47
    %v49 = vsel %vm48, %v46, %v47
    %v50 = vrot.slane %v49, 1
    %vm51 = vcmp.gt.s32.totalorder %v49, %v50
    %v52 = vsel %vm51, %v49, %v50
    %s53 = vtos %v52
    %p54 = scmp.gt.s32.totalorder %s53, 0
    %s55 = scalar_select %p54, %s53, 0
    // While loop
    $region10: #{tpu_custom_call.1} parent=1 // loop_pre_header
      _
    $region11: #{tpu_custom_call.1} parent=1 // loop_header
      %v57 = vphi 1, %v74
      %v58 = vphi 1, %v75
      %v59 = vphi %v25, %v76
      %v60 = vphi %v26, %v77
      %v61 = vphi %v25, %v78
      %v62 = vphi %v26, %v79
      %s63 = sphi %s55, %s80
      %p64 = scmp.gt.s32.totalorder %s63, 0
      %p65 = pneg %p64
    $region12: #{tpu_custom_call.1} parent=1 // loop_header_branch
      %67 = sbr.rel (%p65) target = $region16
    $region13: #{tpu_custom_call.1} parent=1 // loop_body
      %v68 = vand.u32 %v61, 1
      %v69 = vand.u32 %v62, 1
      %vm70 = vcmp.eq.s32.totalorder %v68, 1
      %vm71 = vcmp.eq.s32.totalorder %v69, 1
      %v72 = vmul.u32 %v57, %v59
      %v73 = vmul.u32 %v58, %v60
      %v74 = vsel %vm70, %v72, %v57
      %v75 = vsel %vm71, %v73, %v58
      %v76 = vmul.u32 %v59, %v59
      %v77 = vmul.u32 %v60, %v60
      %v78 = vshra.s32 %v61, 1
      %v79 = vshra.s32 %v62, 1
      %s80 = sshra.s32 %s63, 1
    $region14: #{tpu_custom_call.1} parent=1 // loop_footer
      _
    $region15: #{tpu_custom_call.1} parent=1 // loop_footer_branch
      %56 = sbr.rel target = $region11
    $region16: #{tpu_custom_call.1} parent=1 // loop_exit
      _
    // While loop
    $region17: #{tpu_custom_call.1} parent=1 // loop_pre_header
      _
    $region18: #{tpu_custom_call.1} parent=1 // loop_header
      %v82 = vphi 1, %v98
      %v83 = vphi 1, %v99
      %v84 = vphi %v57, %v100
      %v85 = vphi %v58, %v101
      %s86 = sphi %s27, %s102
      %p87 = scmp.gt.s32.totalorder %s86, 0
      %p88 = pneg %p87
    $region19: #{tpu_custom_call.1} parent=1 // loop_header_branch
      %90 = sbr.rel (%p88) target = $region23
    $region20: #{tpu_custom_call.1} parent=1 // loop_body
      %s91 = sand.u32 %s86, 1
      %p92 = scmp.eq.s32.totalorder %s91, 1
      %v93 = vmul.u32 %v82, %v84
      %v94 = vmul.u32 %v83, %v85
      %s95 = scalar_select %p92, 1, 0
      %v96 = vstv %s95
      %vm97 = vcmp.eq.s32.totalorder %v96, 1
      %v98 = vsel %vm97, %v93, %v82
      %v99 = vsel %vm97, %v94, %v83
      %v100 = vmul.u32 %v84, %v84
      %v101 = vmul.u32 %v85, %v85
      %s102 = sshra.s32 %s86, 1
    $region21: #{tpu_custom_call.1} parent=1 // loop_footer
      _
    $region22: #{tpu_custom_call.1} parent=1 // loop_footer_branch
      %81 = sbr.rel target = $region18
    $region23: #{tpu_custom_call.1} parent=1 // loop_exit
      _
    %103 = vst [vmem:[#allocation7] sm:$0xff] %v82
    %104 = vst [vmem:[#allocation7 + $0x8] sm:$0xff] %v83
    // Predicated region
    $region24: #{tpu_custom_call.1} parent=1 // pred_check
      _
    $region25: #{tpu_custom_call.1} parent=1 // pred_check_branch
      %106 = sbr.rel (0) target = $region27
    $region26: #{tpu_custom_call.1} parent=1 // pred_region
      %s108 = ssub.s32 256, 256
      %109 = vsyncadd [#allocation6], %s108
      %s110 = sshll.u32 [#allocation7], 4
      %s111 = int_to_ptr.vmem [resolvable:$true] %s110
      %116 = dma.vmem_to_hbm [thread:$0]  %s111, 256, %s2, [#allocation6], 128, 128, 8
    $region27: #{tpu_custom_call.1} parent=1 // pred_fallthru
      _
    // Predicated region
    $region28: #{tpu_custom_call.1} parent=1 // pred_check
      _
    $region29: #{tpu_custom_call.1} parent=1 // pred_check_branch
      %118 = sbr.rel (0) target = $region31
    $region30: #{tpu_custom_call.1} parent=1 // pred_region
      %119 = dma.done [#allocation6], 256
    $region31: #{tpu_custom_call.1} parent=1 // pred_fallthru
      _
    %120 = vsyncpa [#allocation5], 1
    %121 = vsyncpa [#allocation6], 1

</llo_original>
